<compile_context>
chip_gen: v6e
topology: v6e:2x2x1
jax: 0.10.0
libtpu: 0.0.40
codegen_flags: <defaults>
</compile_context>

<pallas_src>
import jax
import jax.numpy as jnp
from jax.experimental import pallas as pl
from jax.experimental.pallas import tpu as pltpu


def _avsim_kernel(v_ref, a_ref, o_ref):
    # v_ref / a_ref: (ROWS, D) input tile; o_ref: (1, 1, ROWS) lane-dense tile.
    v = v_ref[...].astype(jnp.float32)
    a = a_ref[...].astype(jnp.float32)

    # Three reductions instead of normalize-then-multiply: no normalized
    # (ROWS, D) temporaries, no full-size divides.
    nv = jnp.sum(v * v, axis=-1)       # (ROWS,) squared L2 norms
    na = jnp.sum(a * a, axis=-1)       # (ROWS,)
    dot = jnp.sum(v * a, axis=-1)      # (ROWS,)

    eps = jnp.float32(1e-12)           # F.normalize clamp: x / max(||x||, eps)
    denom = jnp.maximum(jnp.sqrt(nv), eps) * jnp.maximum(jnp.sqrt(na), eps)
    cos = dot / denom                  # exact combine on tiny per-row vectors

    o_ref[...] = cos.reshape(o_ref.shape).astype(o_ref.dtype)


def _pick_rows(bt, d, itemsize):
    """Row tile: multiple of 128, ~1 MiB per input block, capped by problem size."""
    target_block_bytes = 1 << 20
    rows = (target_block_bytes // max(d * itemsize, 1)) // 128 * 128
    rows = max(128, min(int(rows), 2048))
    rows = min(rows, 128 * pl.cdiv(bt, 128))   # don't exceed padded problem
    return rows


def av_similarity(v_fea, a_fea):
    """Pallas equivalent of AVSimilarity.forward.

    v_fea, a_fea: (B, T, D) arrays -> (B, T) cosine similarity.
    """
    assert v_fea.shape == a_fea.shape
    B, T, D = v_fea.shape
    BT = B * T

    v2 = v_fea.reshape(BT, D)
    a2 = a_fea.reshape(BT, D)

    rows = _pick_rows(BT, D, jnp.dtype(v_fea.dtype).itemsize)
    num_tiles = pl.cdiv(BT, rows)
    bt_pad = num_tiles * rows
    if bt_pad != BT:
        # Zero-padded rows produce cos = 0 / eps^2 = 0 (no NaNs) and are dropped.
        pad = bt_pad - BT
        v2 = jnp.pad(v2, ((0, pad), (0, 0)))
        a2 = jnp.pad(a2, ((0, pad), (0, 0)))

    out = pl.pallas_call(
        _avsim_kernel,
        out_shape=jax.ShapeDtypeStruct((num_tiles, 1, rows), v_fea.dtype),
        grid_spec=pltpu.PrefetchScalarGridSpec(
            num_scalar_prefetch=0,
            grid=(num_tiles,),
            in_specs=[
                pl.BlockSpec((rows, D), lambda i: (i, 0)),
                pl.BlockSpec((rows, D), lambda i: (i, 0)),
            ],
            out_specs=pl.BlockSpec((1, 1, rows), lambda i: (i, 0, 0)),
        ),
        compiler_params=pltpu.CompilerParams(
            dimension_semantics=("parallel",),
            vmem_limit_bytes=32 * 1024 * 1024,
        ),
    )(v2, a2)

    return out.reshape(bt_pad)[:BT].reshape(B, T)


def _reference(v_fea, a_fea):
    eps = 1e-12
    v32 = v_fea.astype(jnp.float32)
    a32 = a_fea.astype(jnp.float32)
    v = v32 / jnp.maximum(jnp.linalg.norm(v32, axis=-1, keepdims=True), eps)
    a = a32 / jnp.maximum(jnp.linalg.norm(a32, axis=-1, keepdims=True), eps)
    return jnp.sum(v * a, axis=-1)


if __name__ == "__main__":
    key = jax.random.PRNGKey(0)
    kv, ka = jax.random.split(key)

    B, T, D = 2, 8, 32  # batch, sequence length, feature dim
    v_fea = jax.random.normal(kv, (B, T, D), dtype=jnp.float32)
    a_fea = jax.random.normal(ka, (B, T, D), dtype=jnp.float32)

    out = jax.block_until_ready(jax.jit(av_similarity)(v_fea, a_fea))
    ref = _reference(v_fea, a_fea)
    assert out.shape == (B, T)
    assert jnp.allclose(out, ref, atol=1e-5, rtol=1e-5)

    # bf16 inputs stay bf16 in HBM and are only upcast inside the kernel.
    v_bf = v_fea.astype(jnp.bfloat16)
    a_bf = a_fea.astype(jnp.bfloat16)
    out_bf = jax.block_until_ready(jax.jit(av_similarity)(v_bf, a_bf))
    ref_bf = _reference(v_bf, a_bf)
    assert out_bf.shape == (B, T)
    assert jnp.allclose(out_bf.astype(jnp.float32), ref_bf, atol=3e-2, rtol=3e-2)

    print("KERNEL_OK")
</pallas_src>

<mosaic_0001>
module attributes {stable_mosaic.version = 11 : i64} {
  func.func @_avsim_kernel(%arg0: i32, %arg1: memref<128x32xf32, #tpu.memory_space<vmem>>, %arg2: memref<128x32xf32, #tpu.memory_space<vmem>>, %arg3: memref<1x1x128xf32, #tpu.memory_space<vmem>>) attributes {dimension_semantics = [#tpu.dimension_semantics<parallel>], iteration_bounds = array<i64: 1>, scalar_prefetch = 0 : i64, scratch_operands = 0 : i64, tpu.core_type = #tpu.core_type<tc>, window_params = [{transform_indices = @transform_0, window_bounds = array<i64: 128, 32>}, {transform_indices = @transform_1, window_bounds = array<i64: 128, 32>}, {transform_indices = @transform_2, window_bounds = array<i64: 1, 1, 128>}]} {
    %c0 = arith.constant 0 : index
    %c0_0 = arith.constant 0 : index
    %0 = vector.load %arg1[%c0, %c0_0] : memref<128x32xf32, #tpu.memory_space<vmem>>, vector<128x32xf32>
    %c0_1 = arith.constant 0 : index
    %c0_2 = arith.constant 0 : index
    %1 = vector.load %arg2[%c0_1, %c0_2] : memref<128x32xf32, #tpu.memory_space<vmem>>, vector<128x32xf32>
    %2 = arith.mulf %0, %0 : vector<128x32xf32>
    %cst = arith.constant dense<0.000000e+00> : vector<128xf32>
    %3 = vector.multi_reduction <add>, %2, %cst [1] : vector<128x32xf32> to vector<128xf32>
    %4 = arith.mulf %1, %1 : vector<128x32xf32>
    %cst_3 = arith.constant dense<0.000000e+00> : vector<128xf32>
    %5 = vector.multi_reduction <add>, %4, %cst_3 [1] : vector<128x32xf32> to vector<128xf32>
    %6 = arith.mulf %0, %1 : vector<128x32xf32>
    %cst_4 = arith.constant dense<0.000000e+00> : vector<128xf32>
    %7 = vector.multi_reduction <add>, %6, %cst_4 [1] : vector<128x32xf32> to vector<128xf32>
    %8 = math.sqrt %3 : vector<128xf32>
    %cst_5 = arith.constant 9.99999996E-13 : f32
    %9 = vector.broadcast %cst_5 : f32 to vector<128xf32>
    %10 = arith.maximumf %8, %9 : vector<128xf32>
    %11 = math.sqrt %5 : vector<128xf32>
    %cst_6 = arith.constant 9.99999996E-13 : f32
    %12 = vector.broadcast %cst_6 : f32 to vector<128xf32>
    %13 = arith.maximumf %11, %12 : vector<128xf32>
    %14 = arith.mulf %10, %13 : vector<128xf32>
    %15 = arith.divf %7, %14 : vector<128xf32>
    %16 = vector.shape_cast %15 : vector<128xf32> to vector<1x1x128xf32>
    %c0_7 = arith.constant 0 : index
    %c0_8 = arith.constant 0 : index
    %c0_9 = arith.constant 0 : index
    %17 = vector.load %arg3[%c0_7, %c0_8, %c0_9] : memref<1x1x128xf32, #tpu.memory_space<vmem>>, vector<1x1x128xf32>
    tpu.vector_store %arg3[%c0_7, %c0_8, %c0_9], %16 {strides = array<i32>} : memref<1x1x128xf32, #tpu.memory_space<vmem>>, vector<1x1x128xf32>,
    return
  }
  func.func @transform_0(%arg0: i32) -> (i32, i32) {
    %c0_i32 = arith.constant 0 : i32
    %c0_i32_0 = arith.constant 0 : i32
    return %arg0, %c0_i32 : i32, i32
  }
  func.func @transform_1(%arg0: i32) -> (i32, i32) {
    %c0_i32 = arith.constant 0 : i32
    %c0_i32_0 = arith.constant 0 : i32
    return %arg0, %c0_i32 : i32, i32
  }
  func.func @transform_2(%arg0: i32) -> (i32, i32, i32) {
    %c0_i32 = arith.constant 0 : i32
    %c0_i32_0 = arith.constant 0 : i32
    %c0_i32_1 = arith.constant 0 : i32
    return %arg0, %c0_i32, %c0_i32_0 : i32, i32, i32
  }
}

</mosaic_0001>

<llo_original>
// kernel: av_similarity.1
$region0: #{av_similarity.1}
  #allocation0 [shape = 'u32[]', space=smem, size = 0x4, offset = 0x4, fixed_abs, tag = 'smem constant byte address 0x4 - core index']
  #allocation1 [shape = 'u32[144,128]{1,0:T(1,128)}', space=vmem, size = 0x12000, scoped, tag = 'internal scratch']
  %s0 = inlined_call_operand.vmem [shape: f32[128,32], index: 0, kind: input, shape index: {}]
  %s1 = inlined_call_operand.vmem [shape: f32[128,32], index: 1, kind: input, shape index: {}]
  %s2 = inlined_call_operand.vmem [shape: f32[1,1,128], index: 2, kind: output, shape index: {}]
  %s3 = sld [smem:[#allocation0]]
  $region18: #{av_similarity.1} parent=0
    _
  %s5 = ssub.s32 1, %s3
  %s6 = scalar_select 0, %s5, %s3
  // Predicated region
  $region2: #{av_similarity.1} parent=0 // pred_check
    _
  $region3: #{av_similarity.1} parent=0 // pred_check_branch
    %8 = sbr.rel (0) target = $region5
  $region4: #{av_similarity.1} parent=0 // pred_region
    _
  $region5: #{av_similarity.1} parent=0 // pred_fallthru
    _
  // Predicated region
  $region6: #{av_similarity.1} parent=0 // pred_check
    _
  $region7: #{av_similarity.1} parent=0 // pred_check_branch
    %10 = sbr.rel (0) target = $region9
  $region8: #{av_similarity.1} parent=0 // pred_region
    _
  $region9: #{av_similarity.1} parent=0 // pred_fallthru
    _
  %v11 = vld [vmem:[%s0] sm:$0xff]
  %v12 = vld [vmem:[%s0 + $0x8] sm:$0xff]
  %v13 = vld [vmem:[%s0 + $0x10] sm:$0xff]
  %v14 = vld [vmem:[%s0 + $0x18] sm:$0xff]
  %v15 = vld [vmem:[%s0 + $0x20] sm:$0xff]
  %v16 = vld [vmem:[%s0 + $0x28] sm:$0xff]
  %v17 = vld [vmem:[%s0 + $0x30] sm:$0xff]
  %v18 = vld [vmem:[%s0 + $0x38] sm:$0xff]
  %v19 = vld [vmem:[%s0 + $0x40] sm:$0xff]
  %v20 = vld [vmem:[%s0 + $0x48] sm:$0xff]
  %v21 = vld [vmem:[%s0 + $0x50] sm:$0xff]
  %v22 = vld [vmem:[%s0 + $0x58] sm:$0xff]
  %v23 = vld [vmem:[%s0 + $0x60] sm:$0xff]
  %v24 = vld [vmem:[%s0 + $0x68] sm:$0xff]
  %v25 = vld [vmem:[%s0 + $0x70] sm:$0xff]
  %v26 = vld [vmem:[%s0 + $0x78] sm:$0xff]
  %v27 = vld [vmem:[%s1] sm:$0xff]
  %v28 = vld [vmem:[%s1 + $0x8] sm:$0xff]
  %v29 = vld [vmem:[%s1 + $0x10] sm:$0xff]
  %v30 = vld [vmem:[%s1 + $0x18] sm:$0xff]
  %v31 = vld [vmem:[%s1 + $0x20] sm:$0xff]
  %v32 = vld [vmem:[%s1 + $0x28] sm:$0xff]
  %v33 = vld [vmem:[%s1 + $0x30] sm:$0xff]
  %v34 = vld [vmem:[%s1 + $0x38] sm:$0xff]
  %v35 = vld [vmem:[%s1 + $0x40] sm:$0xff]
  %v36 = vld [vmem:[%s1 + $0x48] sm:$0xff]
  %v37 = vld [vmem:[%s1 + $0x50] sm:$0xff]
  %v38 = vld [vmem:[%s1 + $0x58] sm:$0xff]
  %v39 = vld [vmem:[%s1 + $0x60] sm:$0xff]
  %v40 = vld [vmem:[%s1 + $0x68] sm:$0xff]
  %v41 = vld [vmem:[%s1 + $0x70] sm:$0xff]
  %v42 = vld [vmem:[%s1 + $0x78] sm:$0xff]
  %v43 = vmul.f32 %v11, %v11
  %v44 = vmul.f32 %v12, %v12
  %v45 = vmul.f32 %v13, %v13
  %v46 = vmul.f32 %v14, %v14
  %v47 = vmul.f32 %v15, %v15
  %v48 = vmul.f32 %v16, %v16
  %v49 = vmul.f32 %v17, %v17
  %v50 = vmul.f32 %v18, %v18
  %v51 = vmul.f32 %v19, %v19
  %v52 = vmul.f32 %v20, %v20
  %v53 = vmul.f32 %v21, %v21
  %v54 = vmul.f32 %v22, %v22
  %v55 = vmul.f32 %v23, %v23
  %v56 = vmul.f32 %v24, %v24
  %v57 = vmul.f32 %v25, %v25
  %v58 = vmul.f32 %v26, %v26
  %vm59 = vcmask 261120
  %v60 = vsel %vm59, %v43, 0.0
  %61 = vadd.xlane.f32.xlu0 %v60
  %v62 = vpop.xlane.xlu0 %61
  %v63 = vsel %vm59, %v44, 0.0
  %64 = vadd.xlane.f32.xlu0 %v63
  %v65 = vpop.xlane.xlu0 %64
  %v66 = vsel %vm59, %v45, 0.0
  %67 = vadd.xlane.f32.xlu0 %v66
  %v68 = vpop.xlane.xlu0 %67
  %v69 = vsel %vm59, %v46, 0.0
  %70 = vadd.xlane.f32.xlu0 %v69
  %v71 = vpop.xlane.xlu0 %70
  %v72 = vsel %vm59, %v47, 0.0
  %73 = vadd.xlane.f32.xlu0 %v72
  %v74 = vpop.xlane.xlu0 %73
  %v75 = vsel %vm59, %v48, 0.0
  %76 = vadd.xlane.f32.xlu0 %v75
  %v77 = vpop.xlane.xlu0 %76
  %v78 = vsel %vm59, %v49, 0.0
  %79 = vadd.xlane.f32.xlu0 %v78
  %v80 = vpop.xlane.xlu0 %79
  %v81 = vsel %vm59, %v50, 0.0
  %82 = vadd.xlane.f32.xlu0 %v81
  %v83 = vpop.xlane.xlu0 %82
  %v84 = vsel %vm59, %v51, 0.0
  %85 = vadd.xlane.f32.xlu0 %v84
  %v86 = vpop.xlane.xlu0 %85
  %v87 = vsel %vm59, %v52, 0.0
  %88 = vadd.xlane.f32.xlu0 %v87
  %v89 = vpop.xlane.xlu0 %88
  %v90 = vsel %vm59, %v53, 0.0
  %91 = vadd.xlane.f32.xlu0 %v90
  %v92 = vpop.xlane.xlu0 %91
  %v93 = vsel %vm59, %v54, 0.0
  %94 = vadd.xlane.f32.xlu0 %v93
  %v95 = vpop.xlane.xlu0 %94
  %v96 = vsel %vm59, %v55, 0.0
  %97 = vadd.xlane.f32.xlu0 %v96
  %v98 = vpop.xlane.xlu0 %97
  %v99 = vsel %vm59, %v56, 0.0
  %100 = vadd.xlane.f32.xlu0 %v99
  %v101 = vpop.xlane.xlu0 %100
  %v102 = vsel %vm59, %v57, 0.0
  %103 = vadd.xlane.f32.xlu0 %v102
  %v104 = vpop.xlane.xlu0 %103
  %v105 = vsel %vm59, %v58, 0.0
  %106 = vadd.xlane.f32.xlu0 %v105
  %v107 = vpop.xlane.xlu0 %106
  %v108 = vmul.f32 %v27, %v27
  %v109 = vmul.f32 %v28, %v28
  %v110 = vmul.f32 %v29, %v29
  %v111 = vmul.f32 %v30, %v30
  %v112 = vmul.f32 %v31, %v31
  %v113 = vmul.f32 %v32, %v32
  %v114 = vmul.f32 %v33, %v33
  %v115 = vmul.f32 %v34, %v34
  %v116 = vmul.f32 %v35, %v35
  %v117 = vmul.f32 %v36, %v36
  %v118 = vmul.f32 %v37, %v37
  %v119 = vmul.f32 %v38, %v38
  %v120 = vmul.f32 %v39, %v39
  %v121 = vmul.f32 %v40, %v40
  %v122 = vmul.f32 %v41, %v41
  %v123 = vmul.f32 %v42, %v42
  %v124 = vsel %vm59, %v108, 0.0
  %125 = vadd.xlane.f32.xlu0 %v124
  %v126 = vpop.xlane.xlu0 %125
  %v127 = vsel %vm59, %v109, 0.0
  %128 = vadd.xlane.f32.xlu0 %v127
  %v129 = vpop.xlane.xlu0 %128
  %v130 = vsel %vm59, %v110, 0.0
  %131 = vadd.xlane.f32.xlu0 %v130
  %v132 = vpop.xlane.xlu0 %131
  %v133 = vsel %vm59, %v111, 0.0
  %134 = vadd.xlane.f32.xlu0 %v133
  %v135 = vpop.xlane.xlu0 %134
  %v136 = vsel %vm59, %v112, 0.0
  %137 = vadd.xlane.f32.xlu0 %v136
  %v138 = vpop.xlane.xlu0 %137
  %v139 = vsel %vm59, %v113, 0.0
  %140 = vadd.xlane.f32.xlu0 %v139
  %v141 = vpop.xlane.xlu0 %140
  %v142 = vsel %vm59, %v114, 0.0
  %143 = vadd.xlane.f32.xlu0 %v142
  %v144 = vpop.xlane.xlu0 %143
  %v145 = vsel %vm59, %v115, 0.0
  %146 = vadd.xlane.f32.xlu0 %v145
  %v147 = vpop.xlane.xlu0 %146
  %v148 = vsel %vm59, %v116, 0.0
  %149 = vadd.xlane.f32.xlu0 %v148
  %v150 = vpop.xlane.xlu0 %149
  %v151 = vsel %vm59, %v117, 0.0
  %152 = vadd.xlane.f32.xlu0 %v151
  %v153 = vpop.xlane.xlu0 %152
  %v154 = vsel %vm59, %v118, 0.0
  %155 = vadd.xlane.f32.xlu0 %v154
  %v156 = vpop.xlane.xlu0 %155
  %v157 = vsel %vm59, %v119, 0.0
  %158 = vadd.xlane.f32.xlu0 %v157
  %v159 = vpop.xlane.xlu0 %158
  %v160 = vsel %vm59, %v120, 0.0
  %161 = vadd.xlane.f32.xlu0 %v160
  %v162 = vpop.xlane.xlu0 %161
  %v163 = vsel %vm59, %v121, 0.0
  %164 = vadd.xlane.f32.xlu0 %v163
  %v165 = vpop.xlane.xlu0 %164
  %v166 = vsel %vm59, %v122, 0.0
  %167 = vadd.xlane.f32.xlu0 %v166
  %v168 = vpop.xlane.xlu0 %167
  %v169 = vsel %vm59, %v123, 0.0
  %170 = vadd.xlane.f32.xlu0 %v169
  %v171 = vpop.xlane.xlu0 %170
  %v172 = vmul.f32 %v11, %v27
  %v173 = vmul.f32 %v12, %v28
  %v174 = vmul.f32 %v13, %v29
  %v175 = vmul.f32 %v14, %v30
  %v176 = vmul.f32 %v15, %v31
  %v177 = vmul.f32 %v16, %v32
  %v178 = vmul.f32 %v17, %v33
  %v179 = vmul.f32 %v18, %v34
  %v180 = vmul.f32 %v19, %v35
  %v181 = vmul.f32 %v20, %v36
  %v182 = vmul.f32 %v21, %v37
  %v183 = vmul.f32 %v22, %v38
  %v184 = vmul.f32 %v23, %v39
  %v185 = vmul.f32 %v24, %v40
  %v186 = vmul.f32 %v25, %v41
  %v187 = vmul.f32 %v26, %v42
  %v188 = vsel %vm59, %v172, 0.0
  %189 = vadd.xlane.f32.xlu0 %v188
  %v190 = vpop.xlane.xlu0 %189
  %v191 = vsel %vm59, %v173, 0.0
  %192 = vadd.xlane.f32.xlu0 %v191
  %v193 = vpop.xlane.xlu0 %192
  %v194 = vsel %vm59, %v174, 0.0
  %195 = vadd.xlane.f32.xlu0 %v194
  %v196 = vpop.xlane.xlu0 %195
  %v197 = vsel %vm59, %v175, 0.0
  %198 = vadd.xlane.f32.xlu0 %v197
  %v199 = vpop.xlane.xlu0 %198
  %v200 = vsel %vm59, %v176, 0.0
  %201 = vadd.xlane.f32.xlu0 %v200
  %v202 = vpop.xlane.xlu0 %201
  %v203 = vsel %vm59, %v177, 0.0
  %204 = vadd.xlane.f32.xlu0 %v203
  %v205 = vpop.xlane.xlu0 %204
  %v206 = vsel %vm59, %v178, 0.0
  %207 = vadd.xlane.f32.xlu0 %v206
  %v208 = vpop.xlane.xlu0 %207
  %v209 = vsel %vm59, %v179, 0.0
  %210 = vadd.xlane.f32.xlu0 %v209
  %v211 = vpop.xlane.xlu0 %210
  %v212 = vsel %vm59, %v180, 0.0
  %213 = vadd.xlane.f32.xlu0 %v212
  %v214 = vpop.xlane.xlu0 %213
  %v215 = vsel %vm59, %v181, 0.0
  %216 = vadd.xlane.f32.xlu0 %v215
  %v217 = vpop.xlane.xlu0 %216
  %v218 = vsel %vm59, %v182, 0.0
  %219 = vadd.xlane.f32.xlu0 %v218
  %v220 = vpop.xlane.xlu0 %219
  %v221 = vsel %vm59, %v183, 0.0
  %222 = vadd.xlane.f32.xlu0 %v221
  %v223 = vpop.xlane.xlu0 %222
  %v224 = vsel %vm59, %v184, 0.0
  %225 = vadd.xlane.f32.xlu0 %v224
  %v226 = vpop.xlane.xlu0 %225
  %v227 = vsel %vm59, %v185, 0.0
  %228 = vadd.xlane.f32.xlu0 %v227
  %v229 = vpop.xlane.xlu0 %228
  %v230 = vsel %vm59, %v186, 0.0
  %231 = vadd.xlane.f32.xlu0 %v230
  %v232 = vpop.xlane.xlu0 %231
  %v233 = vsel %vm59, %v187, 0.0
  %234 = vadd.xlane.f32.xlu0 %v233
  %v235 = vpop.xlane.xlu0 %234
  %v236 = vrsqrt.pop %v62
  %v237 = vmul.f32 %v62, %v236
  %vm238 = vcmp.eq.f32.partialorder %v62, inf
  %v239 = vsel %vm238, %v62, %v237
  %vm240 = vcmp.eq.f32.partialorder %v62, 0.0
  %v241 = vand.u32 %v62, 2147483648
  %v242 = vsel %vm240, %v241, %v239
  %v243 = vrsqrt.pop %v65
  %v244 = vmul.f32 %v65, %v243
  %vm245 = vcmp.eq.f32.partialorder %v65, inf
  %v246 = vsel %vm245, %v65, %v244
  %vm247 = vcmp.eq.f32.partialorder %v65, 0.0
  %v248 = vand.u32 %v65, 2147483648
  %v249 = vsel %vm247, %v248, %v246
  %v250 = vrsqrt.pop %v68
  %v251 = vmul.f32 %v68, %v250
  %vm252 = vcmp.eq.f32.partialorder %v68, inf
  %v253 = vsel %vm252, %v68, %v251
  %vm254 = vcmp.eq.f32.partialorder %v68, 0.0
  %v255 = vand.u32 %v68, 2147483648
  %v256 = vsel %vm254, %v255, %v253
  %v257 = vrsqrt.pop %v71
  %v258 = vmul.f32 %v71, %v257
  %vm259 = vcmp.eq.f32.partialorder %v71, inf
  %v260 = vsel %vm259, %v71, %v258
  %vm261 = vcmp.eq.f32.partialorder %v71, 0.0
  %v262 = vand.u32 %v71, 2147483648
  %v263 = vsel %vm261, %v262, %v260
  %v264 = vrsqrt.pop %v74
  %v265 = vmul.f32 %v74, %v264
  %vm266 = vcmp.eq.f32.partialorder %v74, inf
  %v267 = vsel %vm266, %v74, %v265
  %vm268 = vcmp.eq.f32.partialorder %v74, 0.0
  %v269 = vand.u32 %v74, 2147483648
  %v270 = vsel %vm268, %v269, %v267
  %v271 = vrsqrt.pop %v77
  %v272 = vmul.f32 %v77, %v271
  %vm273 = vcmp.eq.f32.partialorder %v77, inf
  %v274 = vsel %vm273, %v77, %v272
  %vm275 = vcmp.eq.f32.partialorder %v77, 0.0
  %v276 = vand.u32 %v77, 2147483648
  %v277 = vsel %vm275, %v276, %v274
  %v278 = vrsqrt.pop %v80
  %v279 = vmul.f32 %v80, %v278
  %vm280 = vcmp.eq.f32.partialorder %v80, inf
  %v281 = vsel %vm280, %v80, %v279
  %vm282 = vcmp.eq.f32.partialorder %v80, 0.0
  %v283 = vand.u32 %v80, 2147483648
  %v284 = vsel %vm282, %v283, %v281
  %v285 = vrsqrt.pop %v83
  %v286 = vmul.f32 %v83, %v285
  %vm287 = vcmp.eq.f32.partialorder %v83, inf
  %v288 = vsel %vm287, %v83, %v286
  %vm289 = vcmp.eq.f32.partialorder %v83, 0.0
  %v290 = vand.u32 %v83, 2147483648
  %v291 = vsel %vm289, %v290, %v288
  %v292 = vrsqrt.pop %v86
  %v293 = vmul.f32 %v86, %v292
  %vm294 = vcmp.eq.f32.partialorder %v86, inf
  %v295 = vsel %vm294, %v86, %v293
  %vm296 = vcmp.eq.f32.partialorder %v86, 0.0
  %v297 = vand.u32 %v86, 2147483648
  %v298 = vsel %vm296, %v297, %v295
  %v299 = vrsqrt.pop %v89
  %v300 = vmul.f32 %v89, %v299
  %vm301 = vcmp.eq.f32.partialorder %v89, inf
  %v302 = vsel %vm301, %v89, %v300
  %vm303 = vcmp.eq.f32.partialorder %v89, 0.0
  %v304 = vand.u32 %v89, 2147483648
  %v305 = vsel %vm303, %v304, %v302
  %v306 = vrsqrt.pop %v92
  %v307 = vmul.f32 %v92, %v306
  %vm308 = vcmp.eq.f32.partialorder %v92, inf
  %v309 = vsel %vm308, %v92, %v307
  %vm310 = vcmp.eq.f32.partialorder %v92, 0.0
  %v311 = vand.u32 %v92, 2147483648
  %v312 = vsel %vm310, %v311, %v309
  %v313 = vrsqrt.pop %v95
  %v314 = vmul.f32 %v95, %v313
  %vm315 = vcmp.eq.f32.partialorder %v95, inf
  %v316 = vsel %vm315, %v95, %v314
  %vm317 = vcmp.eq.f32.partialorder %v95, 0.0
  %v318 = vand.u32 %v95, 2147483648
  %v319 = vsel %vm317, %v318, %v316
  %v320 = vrsqrt.pop %v98
  %v321 = vmul.f32 %v98, %v320
  %vm322 = vcmp.eq.f32.partialorder %v98, inf
  %v323 = vsel %vm322, %v98, %v321
  %vm324 = vcmp.eq.f32.partialorder %v98, 0.0
  %v325 = vand.u32 %v98, 2147483648
  %v326 = vsel %vm324, %v325, %v323
  %v327 = vrsqrt.pop %v101
  %v328 = vmul.f32 %v101, %v327
  %vm329 = vcmp.eq.f32.partialorder %v101, inf
  %v330 = vsel %vm329, %v101, %v328
  %vm331 = vcmp.eq.f32.partialorder %v101, 0.0
  %v332 = vand.u32 %v101, 2147483648
  %v333 = vsel %vm331, %v332, %v330
  %v334 = vrsqrt.pop %v104
  %v335 = vmul.f32 %v104, %v334
  %vm336 = vcmp.eq.f32.partialorder %v104, inf
  %v337 = vsel %vm336, %v104, %v335
  %vm338 = vcmp.eq.f32.partialorder %v104, 0.0
  %v339 = vand.u32 %v104, 2147483648
  %v340 = vsel %vm338, %v339, %v337
  %v341 = vrsqrt.pop %v107
  %v342 = vmul.f32 %v107, %v341
  %vm343 = vcmp.eq.f32.partialorder %v107, inf
  %v344 = vsel %vm343, %v107, %v342
  %vm345 = vcmp.eq.f32.partialorder %v107, 0.0
  %v346 = vand.u32 %v107, 2147483648
  %v347 = vsel %vm345, %v346, %v344
  %v348 = vmax.f32 %v242, 1e-12
  %v349 = vmax.f32 %v249, 1e-12
  %v350 = vmax.f32 %v256, 1e-12
  %v351 = vmax.f32 %v263, 1e-12
  %v352 = vmax.f32 %v270, 1e-12
  %v353 = vmax.f32 %v277, 1e-12
  %v354 = vmax.f32 %v284, 1e-12
  %v355 = vmax.f32 %v291, 1e-12
  %v356 = vmax.f32 %v298, 1e-12
  %v357 = vmax.f32 %v305, 1e-12
  %v358 = vmax.f32 %v312, 1e-12
  %v359 = vmax.f32 %v319, 1e-12
  %v360 = vmax.f32 %v326, 1e-12
  %v361 = vmax.f32 %v333, 1e-12
  %v362 = vmax.f32 %v340, 1e-12
  %v363 = vmax.f32 %v347, 1e-12
  %v364 = vrsqrt.pop %v126
  %v365 = vmul.f32 %v126, %v364
  %vm366 = vcmp.eq.f32.partialorder %v126, inf
  %v367 = vsel %vm366, %v126, %v365
  %vm368 = vcmp.eq.f32.partialorder %v126, 0.0
  %v369 = vand.u32 %v126, 2147483648
  %v370 = vsel %vm368, %v369, %v367
  %v371 = vrsqrt.pop %v129
  %v372 = vmul.f32 %v129, %v371
  %vm373 = vcmp.eq.f32.partialorder %v129, inf
  %v374 = vsel %vm373, %v129, %v372
  %vm375 = vcmp.eq.f32.partialorder %v129, 0.0
  %v376 = vand.u32 %v129, 2147483648
  %v377 = vsel %vm375, %v376, %v374
  %v378 = vrsqrt.pop %v132
  %v379 = vmul.f32 %v132, %v378
  %vm380 = vcmp.eq.f32.partialorder %v132, inf
  %v381 = vsel %vm380, %v132, %v379
  %vm382 = vcmp.eq.f32.partialorder %v132, 0.0
  %v383 = vand.u32 %v132, 2147483648
  %v384 = vsel %vm382, %v383, %v381
  %v385 = vrsqrt.pop %v135
  %v386 = vmul.f32 %v135, %v385
  %vm387 = vcmp.eq.f32.partialorder %v135, inf
  %v388 = vsel %vm387, %v135, %v386
  %vm389 = vcmp.eq.f32.partialorder %v135, 0.0
  %v390 = vand.u32 %v135, 2147483648
  %v391 = vsel %vm389, %v390, %v388
  %v392 = vrsqrt.pop %v138
  %v393 = vmul.f32 %v138, %v392
  %vm394 = vcmp.eq.f32.partialorder %v138, inf
  %v395 = vsel %vm394, %v138, %v393
  %vm396 = vcmp.eq.f32.partialorder %v138, 0.0
  %v397 = vand.u32 %v138, 2147483648
  %v398 = vsel %vm396, %v397, %v395
  %v399 = vrsqrt.pop %v141
  %v400 = vmul.f32 %v141, %v399
  %vm401 = vcmp.eq.f32.partialorder %v141, inf
  %v402 = vsel %vm401, %v141, %v400
  %vm403 = vcmp.eq.f32.partialorder %v141, 0.0
  %v404 = vand.u32 %v141, 2147483648
  %v405 = vsel %vm403, %v404, %v402
  %v406 = vrsqrt.pop %v144
  %v407 = vmul.f32 %v144, %v406
  %vm408 = vcmp.eq.f32.partialorder %v144, inf
  %v409 = vsel %vm408, %v144, %v407
  %vm410 = vcmp.eq.f32.partialorder %v144, 0.0
  %v411 = vand.u32 %v144, 2147483648
  %v412 = vsel %vm410, %v411, %v409
  %v413 = vrsqrt.pop %v147
  %v414 = vmul.f32 %v147, %v413
  %vm415 = vcmp.eq.f32.partialorder %v147, inf
  %v416 = vsel %vm415, %v147, %v414
  %vm417 = vcmp.eq.f32.partialorder %v147, 0.0
  %v418 = vand.u32 %v147, 2147483648
  %v419 = vsel %vm417, %v418, %v416
  %v420 = vrsqrt.pop %v150
  %v421 = vmul.f32 %v150, %v420
  %vm422 = vcmp.eq.f32.partialorder %v150, inf
  %v423 = vsel %vm422, %v150, %v421
  %vm424 = vcmp.eq.f32.partialorder %v150, 0.0
  %v425 = vand.u32 %v150, 2147483648
  %v426 = vsel %vm424, %v425, %v423
  %v427 = vrsqrt.pop %v153
  %v428 = vmul.f32 %v153, %v427
  %vm429 = vcmp.eq.f32.partialorder %v153, inf
  %v430 = vsel %vm429, %v153, %v428
  %vm431 = vcmp.eq.f32.partialorder %v153, 0.0
  %v432 = vand.u32 %v153, 2147483648
  %v433 = vsel %vm431, %v432, %v430
  %v434 = vrsqrt.pop %v156
  %v435 = vmul.f32 %v156, %v434
  %vm436 = vcmp.eq.f32.partialorder %v156, inf
  %v437 = vsel %vm436, %v156, %v435
  %vm438 = vcmp.eq.f32.partialorder %v156, 0.0
  %v439 = vand.u32 %v156, 2147483648
  %v440 = vsel %vm438, %v439, %v437
  %v441 = vrsqrt.pop %v159
  %v442 = vmul.f32 %v159, %v441
  %vm443 = vcmp.eq.f32.partialorder %v159, inf
  %v444 = vsel %vm443, %v159, %v442
  %vm445 = vcmp.eq.f32.partialorder %v159, 0.0
  %v446 = vand.u32 %v159, 2147483648
  %v447 = vsel %vm445, %v446, %v444
  %v448 = vrsqrt.pop %v162
  %v449 = vmul.f32 %v162, %v448
  %vm450 = vcmp.eq.f32.partialorder %v162, inf
  %v451 = vsel %vm450, %v162, %v449
  %vm452 = vcmp.eq.f32.partialorder %v162, 0.0
  %v453 = vand.u32 %v162, 2147483648
  %v454 = vsel %vm452, %v453, %v451
  %v455 = vrsqrt.pop %v165
  %v456 = vmul.f32 %v165, %v455
  %vm457 = vcmp.eq.f32.partialorder %v165, inf
  %v458 = vsel %vm457, %v165, %v456
  %vm459 = vcmp.eq.f32.partialorder %v165, 0.0
  %v460 = vand.u32 %v165, 2147483648
  %v461 = vsel %vm459, %v460, %v458
  %v462 = vrsqrt.pop %v168
  %v463 = vmul.f32 %v168, %v462
  %vm464 = vcmp.eq.f32.partialorder %v168, inf
  %v465 = vsel %vm464, %v168, %v463
  %vm466 = vcmp.eq.f32.partialorder %v168, 0.0
  %v467 = vand.u32 %v168, 2147483648
  %v468 = vsel %vm466, %v467, %v465
  %v469 = vrsqrt.pop %v171
  %v470 = vmul.f32 %v171, %v469
  %vm471 = vcmp.eq.f32.partialorder %v171, inf
  %v472 = vsel %vm471, %v171, %v470
  %vm473 = vcmp.eq.f32.partialorder %v171, 0.0
  %v474 = vand.u32 %v171, 2147483648
  %v475 = vsel %vm473, %v474, %v472
  %v476 = vmax.f32 %v370, 1e-12
  %v477 = vmax.f32 %v377, 1e-12
  %v478 = vmax.f32 %v384, 1e-12
  %v479 = vmax.f32 %v391, 1e-12
  %v480 = vmax.f32 %v398, 1e-12
  %v481 = vmax.f32 %v405, 1e-12
  %v482 = vmax.f32 %v412, 1e-12
  %v483 = vmax.f32 %v419, 1e-12
  %v484 = vmax.f32 %v426, 1e-12
  %v485 = vmax.f32 %v433, 1e-12
  %v486 = vmax.f32 %v440, 1e-12
  %v487 = vmax.f32 %v447, 1e-12
  %v488 = vmax.f32 %v454, 1e-12
  %v489 = vmax.f32 %v461, 1e-12
  %v490 = vmax.f32 %v468, 1e-12
  %v491 = vmax.f32 %v475, 1e-12
  %v492 = vmul.f32 %v348, %v476
  %v493 = vmul.f32 %v349, %v477
  %v494 = vmul.f32 %v350, %v478
  %v495 = vmul.f32 %v351, %v479
  %v496 = vmul.f32 %v352, %v480
  %v497 = vmul.f32 %v353, %v481
  %v498 = vmul.f32 %v354, %v482
  %v499 = vmul.f32 %v355, %v483
  %v500 = vmul.f32 %v356, %v484
  %v501 = vmul.f32 %v357, %v485
  %v502 = vmul.f32 %v358, %v486
  %v503 = vmul.f32 %v359, %v487
  %v504 = vmul.f32 %v360, %v488
  %v505 = vmul.f32 %v361, %v489
  %v506 = vmul.f32 %v362, %v490
  %v507 = vmul.f32 %v363, %v491
  %v508 = vrcp.pop %v492
  %v509 = vmul.f32 %v190, %v508
  %v510 = vrcp.pop %v493
  %v511 = vmul.f32 %v193, %v510
  %v512 = vrcp.pop %v494
  %v513 = vmul.f32 %v196, %v512
  %v514 = vrcp.pop %v495
  %v515 = vmul.f32 %v199, %v514
  %v516 = vrcp.pop %v496
  %v517 = vmul.f32 %v202, %v516
  %v518 = vrcp.pop %v497
  %v519 = vmul.f32 %v205, %v518
  %v520 = vrcp.pop %v498
  %v521 = vmul.f32 %v208, %v520
  %v522 = vrcp.pop %v499
  %v523 = vmul.f32 %v211, %v522
  %v524 = vrcp.pop %v500
  %v525 = vmul.f32 %v214, %v524
  %v526 = vrcp.pop %v501
  %v527 = vmul.f32 %v217, %v526
  %v528 = vrcp.pop %v502
  %v529 = vmul.f32 %v220, %v528
  %v530 = vrcp.pop %v503
  %v531 = vmul.f32 %v223, %v530
  %v532 = vrcp.pop %v504
  %v533 = vmul.f32 %v226, %v532
  %v534 = vrcp.pop %v505
  %v535 = vmul.f32 %v229, %v534
  %v536 = vrcp.pop %v506
  %v537 = vmul.f32 %v232, %v536
  %v538 = vrcp.pop %v507
  %v539 = vmul.f32 %v235, %v538
  %v556 = vlaneseq
  %v557 = vand.u32 %v556, 127
  %v558 = vlaneseq
  %v559 = vshrl.u32 %v558, 7
  %v560 = vsub.s32 %v557, %v559
  %v561 = vrot.slane %v509, %v560
  %v562 = vadd.s32 %v557, 4294967288
  %v563 = vlaneseq
  %v564 = vshrl.u32 %v563, 7
  %v565 = vsub.s32 %v562, %v564
  %v566 = vrot.slane %v511, %v565
  %vm567 = vcmask 130112
  %v568 = vsel %vm567, %v566, %v561
  %v569 = vadd.s32 %v557, 4294967280
  %v570 = vlaneseq
  %v571 = vshrl.u32 %v570, 7
  %v572 = vsub.s32 %v569, %v571
  %v573 = vrot.slane %v513, %v572
  %vm574 = vcmask 195712
  %v575 = vsel %vm574, %v573, %v568
  %v576 = vadd.s32 %v557, 4294967272
  %v577 = vlaneseq
  %v578 = vshrl.u32 %v577, 7
  %v579 = vsub.s32 %v576, %v578
  %v580 = vrot.slane %v515, %v579
  %vm581 = vcmask 261312
  %v582 = vsel %vm581, %v580, %v575
  %v583 = vadd.s32 %v557, 4294967264
  %v584 = vlaneseq
  %v585 = vshrl.u32 %v584, 7
  %v586 = vsub.s32 %v583, %v585
  %v587 = vrot.slane %v517, %v586
  %vm588 = vcmask 326912
  %v589 = vsel %vm588, %v587, %v582
  %v590 = vadd.s32 %v557, 4294967256
  %v591 = vlaneseq
  %v592 = vshrl.u32 %v591, 7
  %v593 = vsub.s32 %v590, %v592
  %v594 = vrot.slane %v519, %v593
  %vm595 = vcmask 392512
  %v596 = vsel %vm595, %v594, %v589
  %v597 = vadd.s32 %v557, 4294967248
  %v598 = vlaneseq
  %v599 = vshrl.u32 %v598, 7
  %v600 = vsub.s32 %v597, %v599
  %v601 = vrot.slane %v521, %v600
  %vm602 = vcmask 458112
  %v603 = vsel %vm602, %v601, %v596
  %v604 = vadd.s32 %v557, 4294967240
  %v605 = vlaneseq
  %v606 = vshrl.u32 %v605, 7
  %v607 = vsub.s32 %v604, %v606
  %v608 = vrot.slane %v523, %v607
  %vm609 = vcmask 523712
  %v610 = vsel %vm609, %v608, %v603
  %v611 = vadd.s32 %v557, 4294967232
  %v612 = vlaneseq
  %v613 = vshrl.u32 %v612, 7
  %v614 = vsub.s32 %v611, %v613
  %v615 = vrot.slane %v525, %v614
  %vm616 = vcmask 589312
  %v617 = vsel %vm616, %v615, %v610
  %v618 = vadd.s32 %v557, 4294967224
  %v619 = vlaneseq
  %v620 = vshrl.u32 %v619, 7
  %v621 = vsub.s32 %v618, %v620
  %v622 = vrot.slane %v527, %v621
  %vm623 = vcmask 654912
  %v624 = vsel %vm623, %v622, %v617
  %v625 = vadd.s32 %v557, 4294967216
  %v626 = vlaneseq
  %v627 = vshrl.u32 %v626, 7
  %v628 = vsub.s32 %v625, %v627
  %v629 = vrot.slane %v529, %v628
  %vm630 = vcmask 720512
  %v631 = vsel %vm630, %v629, %v624
  %v632 = vadd.s32 %v557, 4294967208
  %v633 = vlaneseq
  %v634 = vshrl.u32 %v633, 7
  %v635 = vsub.s32 %v632, %v634
  %v636 = vrot.slane %v531, %v635
  %vm637 = vcmask 786112
  %v638 = vsel %vm637, %v636, %v631
  %v639 = vadd.s32 %v557, 4294967200
  %v640 = vlaneseq
  %v641 = vshrl.u32 %v640, 7
  %v642 = vsub.s32 %v639, %v641
  %v643 = vrot.slane %v533, %v642
  %vm644 = vcmask 851712
  %v645 = vsel %vm644, %v643, %v638
  %v646 = vadd.s32 %v557, 4294967192
  %v647 = vlaneseq
  %v648 = vshrl.u32 %v647, 7
  %v649 = vsub.s32 %v646, %v648
  %v650 = vrot.slane %v535, %v649
  %vm651 = vcmask 917312
  %v652 = vsel %vm651, %v650, %v645
  %v653 = vadd.s32 %v557, 4294967184
  %v654 = vlaneseq
  %v655 = vshrl.u32 %v654, 7
  %v656 = vsub.s32 %v653, %v655
  %v657 = vrot.slane %v537, %v656
  %vm658 = vcmask 982912
  %v659 = vsel %vm658, %v657, %v652
  %v660 = vadd.s32 %v557, 4294967176
  %v661 = vlaneseq
  %v662 = vshrl.u32 %v661, 7
  %v663 = vsub.s32 %v660, %v662
  %v664 = vrot.slane %v539, %v663
  %vm665 = vcmask 1048512
  %v666 = vsel %vm665, %v664, %v659
  %668 = vst [vmem:[%s2] sm:$0x1] %v666
  // Predicated region
  $region10: #{av_similarity.1} parent=0 // pred_check
    _
  $region11: #{av_similarity.1} parent=0 // pred_check_branch
    %670 = sbr.rel (0) target = $region13
  $region12: #{av_similarity.1} parent=0 // pred_region
    _
  $region13: #{av_similarity.1} parent=0 // pred_fallthru
    _
  // Predicated region
  $region14: #{av_similarity.1} parent=0 // pred_check
    _
  $region15: #{av_similarity.1} parent=0 // pred_check_branch
    %672 = sbr.rel (0) target = $region17
  $region16: #{av_similarity.1} parent=0 // pred_region
    _
  $region17: #{av_similarity.1} parent=0 // pred_fallthru
    _

</llo_original>
